<compile_context>
chip_gen: v6e
topology: v6e:2x2x1
jax: 0.10.0
libtpu: 0.0.40
codegen_flags: <defaults>
</compile_context>

<pallas_src>
import numpy as np
import jax
import jax.numpy as jnp
from jax import lax
from jax.experimental import pallas as pl
from jax.experimental.pallas import tpu as pltpu


_TARGET_BLOCK_BYTES = 6 * 1024 * 1024   # ~4-8 MiB HBM-bound sweet spot
_MIN_BLOCK_BYTES = 2 * 1024 * 1024


def _build_pool_constants(seq_len: int, n: int, dtype):
    """Host-side (numpy) constants.

    Returns:
      onehot: (n, seq_len) exact 0/1 matrix in `dtype` (segment membership),
      scale:  (n, 1) f32 of 1/segment_len, applied after the dot.
    Segment layout mirrors the PyTorch AvgPool exactly.
    """
    segments = seq_len // n
    rem = seq_len % n
    idx = np.arange(seq_len)
    if rem == 0:
        seg_id = idx // segments
        seg_len = np.full((n,), segments, dtype=np.float32)
    else:
        n_round = n - rem
        split = n_round * segments
        seg_id = np.where(idx < split,
                          idx // segments,
                          n_round + (idx - split) // (segments + 1))
        seg_len = np.concatenate([
            np.full((n_round,), segments, dtype=np.float32),
            np.full((n - n_round,), segments + 1, dtype=np.float32),
        ])
    onehot = (seg_id[None, :] == np.arange(n)[:, None]).astype(dtype)  # exact 0/1
    scale = (1.0 / seg_len).astype(np.float32).reshape(n, 1)
    return onehot, scale


def _pick_batch_tile(B: int, per_batch_bytes: int) -> int:
    """Batches per grid step: target ~6 MiB x-blocks, keep >=2 grid steps."""
    tb = max(1, min(B, _TARGET_BLOCK_BYTES // max(per_batch_bytes, 1)))
    if B >= 2:                       # >=2 steps: v7x megacore + pipeline overlap
        tb = min(tb, -(-B // 2))
    tb8 = -(-B // 8)                 # prefer >=8 steps if blocks stay >= ~2 MiB
    if 1 <= tb8 < tb and tb8 * per_batch_bytes >= _MIN_BLOCK_BYTES:
        tb = tb8
    return tb


def _pool_kernel(p_ref, scale_ref, x_ref, o_ref):
    # p_ref:     (n, S)  exact 0/1 one-hot, same dtype as x (resident block)
    # scale_ref: (n, 1)  f32 per-landmark 1/len
    # x_ref:     (TB, S, D) native dtype
    # o_ref:     (TB, n, D)
    p = p_ref[...]
    scale = scale_ref[...]
    tb = x_ref.shape[0]

    def body(b, carry):
        acc = jnp.dot(p, x_ref[b], preferred_element_type=jnp.float32)  # (n, D) f32
        o_ref[b] = (acc * scale).astype(o_ref.dtype)
        return carry

    lax.fori_loop(0, tb, body, 0, unroll=(tb <= 8))


def avg_pool(x, n: int):
    """Pallas equivalent of AvgPool.forward: (B, seq_len, D) -> (B, n, D)."""
    B, seq_len, head_dim = x.shape
    segments = seq_len // n
    assert segments > 0, "num_landmarks should be smaller than the sequence length"

    p_np, scale_np = _build_pool_constants(seq_len, n, x.dtype)
    p = jnp.asarray(p_np)
    scale = jnp.asarray(scale_np)

    itemsize = x.dtype.itemsize
    per_batch_bytes = seq_len * head_dim * itemsize
    TB = _pick_batch_tile(B, per_batch_bytes)
    grid = (pl.cdiv(B, TB),)

    # VMEM budget: double-buffered x + out + P (+ slack). Raise the scoped
    # limit explicitly (v5e default is 16 MiB); stays well under v7x's 64 MiB.
    x_block = TB * seq_len * head_dim * itemsize
    o_block = TB * n * head_dim * itemsize
    p_bytes = n * seq_len * itemsize
    vmem_need = 2 * x_block + 2 * o_block + 2 * p_bytes + 2 * n * 4 + (1 << 20)
    vmem_limit = int(min(max(32 << 20, vmem_need), 100 << 20))

    return pl.pallas_call(
        _pool_kernel,
        out_shape=jax.ShapeDtypeStruct((B, n, head_dim), x.dtype),
        grid=grid,
        in_specs=[
            pl.BlockSpec((n, seq_len), lambda i: (0, 0)),          # P (resident)
            pl.BlockSpec((n, 1), lambda i: (0, 0)),                # scale (resident)
            pl.BlockSpec((TB, seq_len, head_dim), lambda i: (i, 0, 0)),
        ],
        out_specs=pl.BlockSpec((TB, n, head_dim), lambda i: (i, 0, 0)),
        compiler_params=pltpu.CompilerParams(
            dimension_semantics=("parallel",),
            vmem_limit_bytes=vmem_limit,
        ),
    )(p, scale, x)


def _avg_pool_ref(x, n: int):
    """Pure-JAX f32 reference mirroring the PyTorch code exactly."""
    B, seq_len, head_dim = x.shape
    seg = seq_len // n
    xf = x.astype(jnp.float32)
    if seq_len % n == 0:
        return xf.reshape(-1, n, seg, head_dim).mean(axis=-2)
    n_round = n - seq_len % n
    a = xf[:, : n_round * seg, :].reshape(-1, n_round, seg, head_dim).mean(axis=-2)
    b = xf[:, n_round * seg:, :].reshape(-1, n - n_round, seg + 1, head_dim).mean(axis=-2)
    return jnp.concatenate((a, b), axis=-2)


if __name__ == "__main__":
    key = jax.random.PRNGKey(0)
    n_landmarks = 8
    k1, k2, k3, k4 = jax.random.split(key, 4)

    # Case 1: seq_len divisible by n           (B=2, seq=40, D=32), f32
    x_even = jax.random.normal(k1, (2, 40, 32), dtype=jnp.float32)
    out = jax.block_until_ready(avg_pool(x_even, n_landmarks))
    ref = _avg_pool_ref(x_even, n_landmarks)
    assert out.shape == (2, n_landmarks, 32)
    assert jnp.allclose(out, ref, atol=1e-5, rtol=1e-5)

    # Case 2: seq_len NOT divisible by n       (B=2, seq=22, D=32), f32
    x_odd = jax.random.normal(k2, (2, 22, 32), dtype=jnp.float32)
    out = jax.block_until_ready(avg_pool(x_odd, n_landmarks))
    ref = _avg_pool_ref(x_odd, n_landmarks)
    assert out.shape == (2, n_landmarks, 32)
    assert jnp.allclose(out, ref, atol=1e-5, rtol=1e-5)

    # Case 3: B not divisible by TB (B=3 -> TB=2, partial last grid block), f32
    x_part = jax.random.normal(k3, (3, 22, 32), dtype=jnp.float32)
    out = jax.block_until_ready(avg_pool(x_part, n_landmarks))
    ref = _avg_pool_ref(x_part, n_landmarks)
    assert out.shape == (3, n_landmarks, 32)
    assert jnp.allclose(out, ref, atol=1e-5, rtol=1e-5)

    # Case 4: bf16 input (native-dtype MXU path, no f32 upcast of x)
    x_bf16 = jax.random.normal(k4, (2, 22, 32), dtype=jnp.float32).astype(jnp.bfloat16)
    out = jax.block_until_ready(avg_pool(x_bf16, n_landmarks))
    ref = _avg_pool_ref(x_bf16, n_landmarks)  # f32 reference on bf16 data
    assert out.shape == (2, n_landmarks, 32)
    assert jnp.allclose(out.astype(jnp.float32), ref, atol=5e-2, rtol=5e-2)

    print("KERNEL_OK")
</pallas_src>

<mosaic_0001>
module attributes {stable_mosaic.version = 11 : i64} {
  func.func @_pool_kernel(%arg0: i32, %arg1: memref<8x40xf32, #tpu.memory_space<vmem>>, %arg2: memref<8x1xf32, #tpu.memory_space<vmem>>, %arg3: memref<1x40x32xf32, #tpu.memory_space<vmem>>, %arg4: memref<1x8x32xf32, #tpu.memory_space<vmem>>) attributes {dimension_semantics = [#tpu.dimension_semantics<parallel>], iteration_bounds = array<i64: 2>, scalar_prefetch = 0 : i64, scratch_operands = 0 : i64, tpu.core_type = #tpu.core_type<tc>, window_params = [{pipeline_mode = #tpu.pipeline_mode<synchronous>, transform_indices = @transform_0, window_bounds = array<i64: 8, 40>}, {pipeline_mode = #tpu.pipeline_mode<synchronous>, transform_indices = @transform_1, window_bounds = array<i64: 8, 1>}, {transform_indices = @transform_2, window_bounds = array<i64: 1, 40, 32>}, {transform_indices = @transform_3, window_bounds = array<i64: 1, 8, 32>}]} {
    %c0 = arith.constant 0 : index
    %c0_0 = arith.constant 0 : index
    %0 = vector.load %arg1[%c0, %c0_0] : memref<8x40xf32, #tpu.memory_space<vmem>>, vector<8x40xf32>
    %c0_1 = arith.constant 0 : index
    %c0_2 = arith.constant 0 : index
    %1 = vector.load %arg2[%c0_1, %c0_2] : memref<8x1xf32, #tpu.memory_space<vmem>>, vector<8x1xf32>
    %c0_i32 = arith.constant 0 : i32
    %2 = arith.index_cast %c0_i32 : i32 to index
    %c0_3 = arith.constant 0 : index
    %c0_4 = arith.constant 0 : index
    %3 = vector.load %arg3[%2, %c0_3, %c0_4] : memref<1x40x32xf32, #tpu.memory_space<vmem>>, vector<1x40x32xf32>
    %4 = vector.shape_cast %3 : vector<1x40x32xf32> to vector<40x32xf32>
    %cst = arith.constant dense<0.000000e+00> : vector<8x32xf32>
    %5 = tpu.matmul %0, %4, %cst {dimension_numbers = #tpu.dot_dimension_numbers<[1], [0], [0], [1], [0, 0, 1, 1], [], []>} : vector<8x40xf32>, vector<40x32xf32>, vector<8x32xf32> -> vector<8x32xf32>
    %6 = vector.broadcast %1 : vector<8x1xf32> to vector<8x32xf32>
    %7 = arith.mulf %5, %6 : vector<8x32xf32>
    %8 = arith.index_cast %c0_i32 : i32 to index
    %c0_5 = arith.constant 0 : index
    %c0_6 = arith.constant 0 : index
    %9 = vector.load %arg4[%8, %c0_5, %c0_6] : memref<1x8x32xf32, #tpu.memory_space<vmem>>, vector<1x8x32xf32>
    %10 = vector.shape_cast %9 : vector<1x8x32xf32> to vector<8x32xf32>
    %11 = vector.shape_cast %7 : vector<8x32xf32> to vector<1x8x32xf32>
    tpu.vector_store %arg4[%8, %c0_5, %c0_6], %11 {strides = array<i32>} : memref<1x8x32xf32, #tpu.memory_space<vmem>>, vector<1x8x32xf32>,
    %c1_i32 = arith.constant 1 : i32
    return
  }
  func.func @transform_0(%arg0: i32) -> (i32, i32) {
    %c0_i32 = arith.constant 0 : i32
    %c0_i32_0 = arith.constant 0 : i32
    %c0_i32_1 = arith.constant 0 : i32
    return %c0_i32, %c0_i32_0 : i32, i32
  }
  func.func @transform_1(%arg0: i32) -> (i32, i32) {
    %c0_i32 = arith.constant 0 : i32
    %c0_i32_0 = arith.constant 0 : i32
    %c0_i32_1 = arith.constant 0 : i32
    return %c0_i32, %c0_i32_0 : i32, i32
  }
  func.func @transform_2(%arg0: i32) -> (i32, i32, i32) {
    %c0_i32 = arith.constant 0 : i32
    %c0_i32_0 = arith.constant 0 : i32
    %c0_i32_1 = arith.constant 0 : i32
    return %arg0, %c0_i32, %c0_i32_0 : i32, i32, i32
  }
  func.func @transform_3(%arg0: i32) -> (i32, i32, i32) {
    %c0_i32 = arith.constant 0 : i32
    %c0_i32_0 = arith.constant 0 : i32
    %c0_i32_1 = arith.constant 0 : i32
    return %arg0, %c0_i32, %c0_i32_0 : i32, i32, i32
  }
}

</mosaic_0001>

<llo_original>
// kernel: tpu_custom_call.1
$region0: #{tpu_custom_call.1}
  #allocation0 [shape = 'u32[]', space=smem, size = 0x4, offset = 0x4, fixed_abs, tag = 'smem constant byte address 0x4 - core index']
  #allocation1 [shape = 'u32[144,128]{1,0:T(1,128)}', space=vmem, size = 0x12000, scoped, tag = 'internal scratch']
  %s0 = inlined_call_operand.vmem [shape: f32[8,40], index: 0, kind: input, shape index: {}]
  %s1 = inlined_call_operand.vmem [shape: f32[8,1], index: 1, kind: input, shape index: {}]
  %s2 = inlined_call_operand.vmem [shape: f32[2,40,32], index: 2, kind: input, shape index: {}]
  %s3 = inlined_call_operand.hbm [shape: f32[2,8,32], index: 3, kind: output, shape index: {}]
  %s4 = sld [smem:[#allocation0]]
  $region45: #{tpu_custom_call.1} parent=0
    _
  %s6 = ssub.s32 1, %s4
  %s7 = scalar_select 0, %s6, %s4
  $region1: #{tpu_custom_call.1} parent=0
    #allocation2 [shape = 'u8[8192]{0}', space=vmem, size = 0x2000, scoped, tag = 'output window, operand 0']
    #allocation3 [shape = 's32[2]{0}', space=sflag, size = 0x8, scoped, tag = 'scoped memory for tpu_custom_call.1']
    %8 = vsyncpa [#allocation3], 0
    %s9 = scalar_lea.sflag [#allocation3], 1
    %10 = vsyncpa %s9, 0
    loop: start=0, step=1, limit=4
    $region2: #{tpu_custom_call.1} parent=1 // loop_pre_header
      _
    $region3: #{tpu_custom_call.1} parent=1 // loop_header
      %s12 = sphi 0, %s16
      %p13 = scmp.ge.s32.totalorder %s12, 4
      %s20 = sphi 0, %s20
      %s22 = sphi 0, %s20
      %s23 = sphi 0, %s22
      %s37 = sphi 0, %s23
      %s41 = sphi 0, %s41
      %s43 = sphi 0, %s41
      %s44 = sphi 0, %s43
      %s58 = sphi 0, %s44
      %s64 = sphi 0, %s66
      %s67 = sphi 0, %s64
      %s68 = sphi 0, %s67
      %s84 = sphi 0, %s68
      %s90 = sphi 0, %s92
      %s93 = sphi 0, %s90
      %s94 = sphi 0, %s93
      %s110 = sphi 0, %s94
    $region4: #{tpu_custom_call.1} parent=1 // loop_header_branch
      %15 = sbr.rel (%p13) target = $region8
    $region5: #{tpu_custom_call.1} parent=1 // loop_body
      %s17 = ssub.s32 %s12, 1
      %s18 = ssub.s32 %s12, 2
      %s19 = sadd.s32 %s12, 1
      %s21 = sadd.s32 %s20, 1
      %p24 = scmp.eq.s32.totalorder %s12, 1
      %p25 = scmp.ne.s32.totalorder %s20, %s22
      %p26 = scmp.eq.s32.totalorder %s12, 0
      %p27 = por %p25, %p26
      %p28 = scmp.ne.s32.totalorder %s20, %s22
      %p29 = scmp.eq.s32.totalorder %s17, 1
      %p30 = por %p28, %p29
      %p31 = scmp.ne.s32.totalorder %s22, %s23
      %p32 = scmp.eq.s32.totalorder %s17, 0
      %p33 = por %p31, %p32
      %p34 = scmp.ne.s32.totalorder %s22, %s23
      %p35 = scmp.eq.s32.totalorder %s18, 1
      %p36 = por %p34, %p35
      %p38 = scmp.ne.s32.totalorder %s23, %s37
      %p39 = scmp.eq.s32.totalorder %s18, 0
      %p40 = por %p38, %p39
      %s42 = sadd.s32 %s41, 1
      %p45 = scmp.eq.s32.totalorder %s12, 1
      %p46 = scmp.ne.s32.totalorder %s41, %s43
      %p47 = scmp.eq.s32.totalorder %s12, 0
      %p48 = por %p46, %p47
      %p49 = scmp.ne.s32.totalorder %s41, %s43
      %p50 = scmp.eq.s32.totalorder %s17, 1
      %p51 = por %p49, %p50
      %p52 = scmp.ne.s32.totalorder %s43, %s44
      %p53 = scmp.eq.s32.totalorder %s17, 0
      %p54 = por %p52, %p53
      %p55 = scmp.ne.s32.totalorder %s43, %s44
      %p56 = scmp.eq.s32.totalorder %s18, 1
      %p57 = por %p55, %p56
      %p59 = scmp.ne.s32.totalorder %s44, %s58
      %p60 = scmp.eq.s32.totalorder %s18, 0
      %p61 = por %p59, %p60
      %s62 = ssub.s32 %s12, %s19
      %p63 = scmp.eq.s32.totalorder %s62, 0
      %s65 = sadd.s32 %s64, 1
      %s66 = scalar_select %p63, %s64, %s65
      %p69 = pneg %p63
      %p70 = scmp.eq.s32.totalorder %s12, 1
      %p71 = por %p69, %p70
      %p72 = scmp.ne.s32.totalorder %s64, %s67
      %p73 = scmp.eq.s32.totalorder %s12, 0
      %p74 = por %p72, %p73
      %p75 = scmp.ne.s32.totalorder %s64, %s67
      %p76 = scmp.eq.s32.totalorder %s17, 1
      %p77 = por %p75, %p76
      %p78 = scmp.ne.s32.totalorder %s67, %s68
      %p79 = scmp.eq.s32.totalorder %s17, 0
      %p80 = por %p78, %p79
      %p81 = scmp.ne.s32.totalorder %s67, %s68
      %p82 = scmp.eq.s32.totalorder %s18, 1
      %p83 = por %p81, %p82
      %p85 = scmp.ne.s32.totalorder %s68, %s84
      %p86 = scmp.eq.s32.totalorder %s18, 0
      %p87 = por %p85, %p86
      %s88 = ssub.s32 %s12, %s19
      %p89 = scmp.eq.s32.totalorder %s88, 0
      %s91 = sadd.s32 %s90, 1
      %s92 = scalar_select %p89, %s90, %s91
      %p95 = pneg %p89
      %p96 = scmp.eq.s32.totalorder %s12, 1
      %p97 = por %p95, %p96
      %p98 = scmp.ne.s32.totalorder %s90, %s93
      %p99 = scmp.eq.s32.totalorder %s12, 0
      %p100 = por %p98, %p99
      %p101 = scmp.ne.s32.totalorder %s90, %s93
      %p102 = scmp.eq.s32.totalorder %s17, 1
      %p103 = por %p101, %p102
      %p104 = scmp.ne.s32.totalorder %s93, %s94
      %p105 = scmp.eq.s32.totalorder %s17, 0
      %p106 = por %p104, %p105
      %p107 = scmp.ne.s32.totalorder %s93, %s94
      %p108 = scmp.eq.s32.totalorder %s18, 1
      %p109 = por %p107, %p108
      %p111 = scmp.ne.s32.totalorder %s94, %s110
      %p112 = scmp.eq.s32.totalorder %s18, 0
      %p113 = por %p111, %p112
      %p114 = scmp.le.s32.totalorder 1, %s12
      %p115 = scmp.lt.s32.totalorder %s12, 3
      %p116 = pnand %p114, %p115
      %p117 = pneg %p116
      // Predicated region
      $region9: #{tpu_custom_call.1} parent=5 // pred_check
        _
      $region10: #{tpu_custom_call.1} parent=5 // pred_check_branch
        %119 = sbr.rel (%p116) target = $region12
      $region11: #{tpu_custom_call.1} parent=5 // pred_region
        %s120 = ssub.s32 %s12, 1
        // Predicated region
        $region13: #{tpu_custom_call.1} parent=11 // pred_check
          %p121 = pneg %p33
        $region14: #{tpu_custom_call.1} parent=11 // pred_check_branch
          %123 = sbr.rel (%p121) target = $region16
        $region15: #{tpu_custom_call.1} parent=11 // pred_region
          _
        $region16: #{tpu_custom_call.1} parent=11 // pred_fallthru
          _
        // Predicated region
        $region17: #{tpu_custom_call.1} parent=11 // pred_check
          %p124 = pneg %p54
        $region18: #{tpu_custom_call.1} parent=11 // pred_check_branch
          %126 = sbr.rel (%p124) target = $region20
        $region19: #{tpu_custom_call.1} parent=11 // pred_region
          _
        $region20: #{tpu_custom_call.1} parent=11 // pred_fallthru
          _
      $region12: #{tpu_custom_call.1} parent=5 // pred_fallthru
        _
      %p127 = scmp.lt.s32.totalorder %s12, 2
      // Predicated region
      $region21: #{tpu_custom_call.1} parent=5 // pred_check
        %p128 = pneg %p127
      $region22: #{tpu_custom_call.1} parent=5 // pred_check_branch
        %130 = sbr.rel (%p128) target = $region24
      $region23: #{tpu_custom_call.1} parent=5 // pred_region
        // Predicated region
        $region25: #{tpu_custom_call.1} parent=23 // pred_check
          %p131 = pneg %p74
        $region26: #{tpu_custom_call.1} parent=23 // pred_check_branch
          %133 = sbr.rel (%p131) target = $region28
        $region27: #{tpu_custom_call.1} parent=23 // pred_region
          %p134 = scmp.lt.s32.totalorder %s12, 1
          %s135 = scalar_select %p134, %s12, 1
          %s136 = smul.addr %s135, 5
          %s137 = smul.addr %s136, 8
          %s138 = scalar_lea.vmem %s2, %s137
        $region28: #{tpu_custom_call.1} parent=23 // pred_fallthru
          _
      $region24: #{tpu_custom_call.1} parent=5 // pred_fallthru
        _
      %p139 = scmp.le.s32.totalorder 1, %s12
      %p140 = scmp.lt.s32.totalorder %s12, 3
      %p141 = pnand %p139, %p140
      %p142 = pneg %p141
      // Predicated region
      $region29: #{tpu_custom_call.1} parent=5 // pred_check
        _
      $region30: #{tpu_custom_call.1} parent=5 // pred_check_branch
        %144 = sbr.rel (%p141) target = $region32
      $region31: #{tpu_custom_call.1} parent=5 // pred_region
        %s145 = ssub.s32 %s12, 1
        %p146 = pneg %p33
        %p147 = pneg %p30
        %p148 = pneg %p54
        %p149 = pneg %p51
        %p150 = scmp.lt.s32.totalorder %s17, 1
        %s151 = scalar_select %p150, %s17, 1
        %s152 = smul.addr %s151, 5
        %s153 = smul.addr %s152, 8
        %s154 = scalar_lea.vmem %s2, %s153
        %p155 = pneg %p80
        %p156 = pneg %p77
        %p157 = pneg %p106
        %p158 = pneg %p103
        %s159 = sand.u32 %s93, 1
        %s160 = scalar_lea.sflag [#allocation3], %s159
        %s161 = sand.u32 %s93, 1
        %s162 = smul.addr %s161, 8
        %s163 = scalar_lea.vmem [#allocation2], %s162
        %p164 = scmp.lt.s32.totalorder %s17, 1
        %s165 = scalar_select %p164, %s17, 1
        %s166 = smul.addr %s165, 5
        %s167 = smul.addr %s166, 8
        %s168 = scalar_lea.vmem %s2, %s167
        %v169 = vld [vmem:[%s0] sm:$0xff]
        %v170 = vld [vmem:[%s1] sm:$0xff]
        %v171 = vld [vmem:[%s168] sm:$0xff]
        %v172 = vld [vmem:[%s168 + $0x8] sm:$0xff]
        %v173 = vld [vmem:[%s168 + $0x10] sm:$0xff]
        %v174 = vld [vmem:[%s168 + $0x18] sm:$0xff]
        %v175 = vld [vmem:[%s168 + $0x20] sm:$0xff]
        %vm176 = vcmask 326656
        %v178 = vsel %vm176, %v169, 0
        %180 = vmatprep.subr.mxu0 0.0
        %181 = vmatpush1.msra.mxu0 0.0
        %182 = vmatprep.subr.mxu0 0.0
        %183 = vmatpush1.msra.mxu0 0.0
        %184 = vmatprep.subr.mxu0 0.0
        %185 = vmatpush1.msra.mxu0 0.0
        %186 = vmatprep.subr.mxu0 0.0
        %187 = vmatpush1.msra.mxu0 0.0
        %188 = vmatprep.subr.mxu0 0.0
        %189 = vmatpush1.msra.mxu0 0.0
        %190 = vmatprep.subr.mxu0 0.0
        %191 = vmatpush1.msra.mxu0 0.0
        %192 = vmatprep.subr.mxu0 0.0
        %193 = vmatpush1.msra.mxu0 0.0
        %194 = vmatprep.subr.mxu0 0.0
        %195 = vmatpush1.msra.mxu0 0.0
        %196 = vmatprep.subr.mxu0 0.0
        %197 = vmatpush1.msra.mxu0 0.0
        %198 = vmatprep.subr.mxu0 0.0
        %199 = vmatpush1.msra.mxu0 0.0
        %200 = vmatprep.subr.mxu0 0.0
        %201 = vmatpush1.msra.mxu0 0.0
        %202 = vmatprep.subr.mxu0 0.0
        %203 = vmatpush1.msra.mxu0 %v175
        %204 = vmatprep.subr.mxu0 0.0
        %205 = vmatpush1.msra.mxu0 %v174
        %206 = vmatprep.subr.mxu0 0.0
        %207 = vmatpush1.msra.mxu0 %v173
        %208 = vmatprep.subr.mxu0 0.0
        %209 = vmatpush1.msra.mxu0 %v172
        %210 = vmatprep.subr.mxu0 0.0
        %211 = vmatpush1.msra.mxu0 %v171
        %212 = vmatprep.subr.mxu0 0.0
        %213 = vmatpush2.msra.mxu0 0.0
        %214 = vmatprep.subr.mxu0 0.0
        %215 = vmatpush2.msra.mxu0 0.0
        %216 = vmatprep.subr.mxu0 0.0
        %217 = vmatpush2.msra.mxu0 0.0
        %218 = vmatprep.subr.mxu0 0.0
        %219 = vmatpush2.msra.mxu0 0.0
        %220 = vmatprep.subr.mxu0 0.0
        %221 = vmatpush2.msra.mxu0 0.0
        %222 = vmatprep.subr.mxu0 0.0
        %223 = vmatpush2.msra.mxu0 0.0
        %224 = vmatprep.subr.mxu0 0.0
        %225 = vmatpush2.msra.mxu0 0.0
        %226 = vmatprep.subr.mxu0 0.0
        %227 = vmatpush2.msra.mxu0 0.0
        %228 = vmatprep.subr.mxu0 0.0
        %229 = vmatpush2.msra.mxu0 0.0
        %230 = vmatprep.subr.mxu0 0.0
        %231 = vmatpush2.msra.mxu0 0.0
        %232 = vmatprep.subr.mxu0 0.0
        %233 = vmatpush2.msra.mxu0 0.0
        %234 = vmatprep.subr.mxu0 0.0
        %235 = vmatpush2.msra.mxu0 0.0
        %236 = vmatprep.subr.mxu0 0.0
        %237 = vmatpush2.msra.mxu0 0.0
        %238 = vmatprep.subr.mxu0 0.0
        %239 = vmatpush2.msra.mxu0 0.0
        %240 = vmatprep.subr.mxu0 0.0
        %241 = vmatpush2.msra.mxu0 0.0
        %242 = vmatprep.subr.mxu0 0.0
        %243 = vmatpush2.msra.mxu0 0.0
        %244 = vmatprep.mubr.f32.mxu0 0.0
        %245 = vmatmul.mubr.f32.gmra.mxu0 %v178
        %v246 = vpop.f32.mrf.mxu0
        %v247 = vadd.f32 0.0, %v246
        %v248 = vpop.f32.mrf.mxu0
        %249 = vdwg.mxu0
        %251 = vset.pattern.permute.xlu0 0
        %252 = vperm.xlu0 %251, %v170
        %v253 = vpop.permute.xlu0 %252
        %v255 = vmul.f32 %v247, %v253
        %vm256 = vcmask 261120
        %257 = vst.msk [vmem:[%s163] sm:$0xff] %vm256, %v255
        %s258 = sand.u32 %s93, 1
        %s259 = scalar_lea.sflag [#allocation3], %s258
        %s260 = sand.u32 %s93, 1
        %s261 = smul.addr %s260, 8
        %s262 = scalar_lea.vmem [#allocation2], %s261
        // Predicated region
        $region33: #{tpu_custom_call.1} parent=31 // pred_check
          %p263 = pneg %p103
        $region34: #{tpu_custom_call.1} parent=31 // pred_check_branch
          %265 = sbr.rel (%p263) target = $region36
        $region35: #{tpu_custom_call.1} parent=31 // pred_region
          %s267 = ssub.s32 128, 128
          %268 = vsyncadd %s259, %s267
          %s269 = smul.addr %s17, 128
          %s270 = scalar_lea.hbm %s3, %s269
          %s272 = sshll.u32 %s262, 4
          %s273 = int_to_ptr.vmem [resolvable:$true] %s272
          %275 = dma.vmem_to_hbm [thread:$0]  %s273, 128, %s270, %s259
        $region36: #{tpu_custom_call.1} parent=31 // pred_fallthru
          _
      $region32: #{tpu_custom_call.1} parent=5 // pred_fallthru
        _
      %p276 = scmp.le.s32.totalorder 2, %s12
      // Predicated region
      $region37: #{tpu_custom_call.1} parent=5 // pred_check
        %p277 = pneg %p276
      $region38: #{tpu_custom_call.1} parent=5 // pred_check_branch
        %279 = sbr.rel (%p277) target = $region40
      $region39: #{tpu_custom_call.1} parent=5 // pred_region
        %s280 = ssub.s32 %s12, 2
        // Predicated region
        $region41: #{tpu_custom_call.1} parent=39 // pred_check
          %p281 = pneg %p109
        $region42: #{tpu_custom_call.1} parent=39 // pred_check_branch
          %283 = sbr.rel (%p281) target = $region44
        $region43: #{tpu_custom_call.1} parent=39 // pred_region
          %s284 = sand.u32 %s94, 1
          %s285 = scalar_lea.sflag [#allocation3], %s284
          %s286 = sand.u32 %s94, 1
          %s287 = smul.addr %s286, 8
          %s288 = scalar_lea.vmem [#allocation2], %s287
          %289 = dma.done %s285, 128
        $region44: #{tpu_custom_call.1} parent=39 // pred_fallthru
          _
      $region40: #{tpu_custom_call.1} parent=5 // pred_fallthru
        _
    $region6: #{tpu_custom_call.1} parent=1 // loop_footer
      %s16 = sadd.s32 1, %s12
    $region7: #{tpu_custom_call.1} parent=1 // loop_footer_branch
      %11 = sbr.rel target = $region3
    $region8: #{tpu_custom_call.1} parent=1 // loop_exit
      _
    %290 = vsyncpa [#allocation3], 1
    %s291 = scalar_lea.sflag [#allocation3], 1
    %292 = vsyncpa %s291, 1

</llo_original>
